<compile_context>
chip_gen: v6e
topology: v6e:2x2x1
jax: 0.10.0
libtpu: 0.0.40
codegen_flags: <defaults>
</compile_context>

<pallas_src>
import functools

import numpy as np

import jax
import jax.numpy as jnp
from jax.experimental import pallas as pl
from jax.experimental.pallas import tpu as pltpu


def _round_up(x, m):
    return ((x + m - 1) // m) * m


# -----------------------------------------------------------------------------
# Kernel
# -----------------------------------------------------------------------------
def _ffn_kernel(x_ref, w1_ref, b1_ref, w2_ref, b2_ref, o_ref, *acc_scratch):
    """Grid = (row tiles, d_ff tiles); d_ff ("k") is the reduction axis (last).

    x_ref:   (tm, d_model_p)   compute dtype (bf16)
    w1_ref:  (d_model_p, tk)   compute dtype
    b1_ref:  (1, tk)           f32
    w2_ref:  (tk, d_model_p)   compute dtype
    b2_ref:  (1, d_model_p)    f32
    o_ref:   (tm, d_model_p)   output dtype (k-invariant block -> resident)
    acc_scratch: optional (tm, d_model_p) f32 scratch; omitted when the output
                 dtype is f32 (we accumulate straight into o_ref).
    """
    acc_ref = acc_scratch[0] if acc_scratch else o_ref
    k = pl.program_id(1)

    @pl.when(k == 0)
    def _init():
        # Fold linear_2's bias into the accumulator init -> pure-cast epilogue.
        acc_ref[...] = jnp.broadcast_to(
            b2_ref[...].astype(acc_ref.dtype), acc_ref.shape)

    # linear_1 for this d_ff slice; bias + ReLU in f32.
    h = jnp.dot(x_ref[...], w1_ref[...], preferred_element_type=jnp.float32)
    h = jnp.maximum(h + b1_ref[...], 0.0)
    # dropout: identity (eval mode).
    # TODO(synk): training-mode dropout would use pltpu.prng_random_bits here.

    # linear_2 partial product for this d_ff slice, accumulated in f32.
    acc_ref[...] += jnp.dot(h.astype(w2_ref.dtype), w2_ref[...],
                            preferred_element_type=jnp.float32)

    if acc_scratch:
        @pl.when(k == pl.num_programs(1) - 1)
        def _finalize():
            o_ref[...] = acc_ref[...].astype(o_ref.dtype)


# -----------------------------------------------------------------------------
# Generation-aware configuration
# -----------------------------------------------------------------------------
@functools.lru_cache(maxsize=1)
def _chip_config():
    kind = ""
    try:
        kind = jax.devices()[0].device_kind.lower()
    except Exception:
        pass
    vmem_cap = None
    try:
        vmem_cap = int(pltpu.get_tpu_info().vmem_capacity_bytes)
    except Exception:
        pass
    if vmem_cap is None:
        vmem_cap = (128 * 1024 * 1024
                    if any(t in kind for t in ("v4", "v5", "v6"))
                    else 64 * 1024 * 1024)

    if vmem_cap >= 128 * 1024 * 1024:
        # v5e / v6e class: 128 MiB VMEM, one TensorCore per chip.
        return dict(vmem_limit=100 * 1024 * 1024,
                    target_tm=1024,
                    target_tk=1024 if "v5" in kind else 512,
                    multi_core=False)
    # v7x class: ~64 MiB per-TC VMEM, two TensorCores per chip.
    return dict(vmem_limit=52 * 1024 * 1024,
                target_tm=512,
                target_tk=512,
                multi_core=True)


def _divisor_tile(total, target):
    """Largest multiple of 128 that divides `total` (itself a multiple of 128)
    and is <= target.  Always >= 128."""
    best = 128
    d = 256
    limit = min(total, target)
    while d <= limit:
        if total % d == 0:
            best = d
        d += 128
    return best


def _vmem_bytes(tm, tk, d_model_p, comp_bytes, out_bytes, use_acc):
    b = 2 * tm * d_model_p * comp_bytes          # x tile (double-buffered)
    b += 2 * d_model_p * tk * comp_bytes         # W1 slice
    b += 2 * tk * d_model_p * comp_bytes         # W2 slice
    b += 2 * 8 * tk * 4                          # b1 slice (sublane-padded)
    b += 2 * 8 * d_model_p * 4                   # b2
    b += 2 * tm * d_model_p * out_bytes          # output tile
    if use_acc:
        b += tm * d_model_p * 4                  # f32 accumulator scratch
    return b


def _select_tiles(m, d_model_p, d_ff_p, out_dtype, cfg):
    comp_bytes = 2                                # bf16 MXU operands
    out_dtype = np.dtype(out_dtype)
    out_bytes = out_dtype.itemsize
    use_acc = out_dtype != np.dtype(np.float32)
    budget = int(cfg["vmem_limit"] * 0.9)         # headroom for compiler scratch

    # tk: divisor of the 128-padded d_ff closest to (<=) the target -> no
    # wasted MXU work / weight traffic on dead columns.
    tk = _divisor_tile(d_ff_p, cfg["target_tk"])
    # tm IS the per-k-step arithmetic intensity; keep it as large as the
    # actual row count and the VMEM budget allow.
    tm = min(cfg["target_tm"], _round_up(m, 128))
    if cfg["multi_core"] and m > 128:
        # Ensure >= 2 row tiles so both v7x TensorCores get work.
        tm = min(tm, _round_up((m + 1) // 2, 128))

    def fits(tm_, tk_):
        return _vmem_bytes(tm_, tk_, d_model_p, comp_bytes,
                           out_bytes, use_acc) <= budget

    while not fits(tm, tk):
        if tk > 256:
            tk = _divisor_tile(d_ff_p, tk - 128)  # shrink weight slice first
        elif tm > 128:
            tm -= 128                             # then the row tile
        elif tk > 128:
            tk = 128
        else:
            break
    return tm, tk, use_acc


# -----------------------------------------------------------------------------
# Wrappers
# -----------------------------------------------------------------------------
def prepare_ffn_params(w1, b1, w2, b2, *, compute_dtype=jnp.bfloat16):
    """One-time weight prep (do this OUTSIDE the hot path): cast to the MXU
    compute dtype and zero-pad to 128-aligned shapes.  Zero-padding is exact:
    padded d_model rows/cols contribute 0; padded d_ff columns have zero bias
    -> relu(0)=0 -> multiply zero rows of W2 -> contribute 0."""
    d_model, d_ff = w1.shape
    d_model_p = _round_up(d_model, 128)
    d_ff_p = _round_up(d_ff, 128)
    w1_p = jnp.pad(w1.astype(compute_dtype),
                   ((0, d_model_p - d_model), (0, d_ff_p - d_ff)))
    b1_p = jnp.pad(b1.astype(jnp.float32), (0, d_ff_p - d_ff)).reshape(1, d_ff_p)
    w2_p = jnp.pad(w2.astype(compute_dtype),
                   ((0, d_ff_p - d_ff), (0, d_model_p - d_model)))
    b2_p = jnp.pad(b2.astype(jnp.float32),
                   (0, d_model_p - d_model)).reshape(1, d_model_p)
    return {"w1": w1_p, "b1": b1_p, "w2": w2_p, "b2": b2_p,
            "d_model": int(d_model), "d_ff": int(d_ff),
            "compute_dtype": np.dtype(compute_dtype)}


@functools.partial(
    jax.jit,
    static_argnames=("d_model", "tm", "tk", "use_acc", "vmem_limit_bytes",
                     "compute_dtype"))
def _ffn_call(x2d, w1_p, b1_p, w2_p, b2_p, *, d_model, tm, tk, use_acc,
              vmem_limit_bytes, compute_dtype):
    m = x2d.shape[0]
    d_model_p, d_ff_p = w1_p.shape
    m_p = _round_up(m, tm)

    # Only the activations are cast/padded per call (weights already prepped).
    x_p = jnp.pad(x2d.astype(compute_dtype),
                  ((0, m_p - m), (0, d_model_p - d_model)))

    grid = (m_p // tm, d_ff_p // tk)               # reduction (d_ff) axis last
    scratch = [pltpu.VMEM((tm, d_model_p), jnp.float32)] if use_acc else []

    out = pl.pallas_call(
        _ffn_kernel,
        out_shape=jax.ShapeDtypeStruct((m_p, d_model_p), x2d.dtype),
        grid_spec=pltpu.PrefetchScalarGridSpec(
            num_scalar_prefetch=0,
            grid=grid,
            in_specs=[
                pl.BlockSpec((tm, d_model_p), lambda i, k: (i, 0)),   # x (k-inv)
                pl.BlockSpec((d_model_p, tk), lambda i, k: (0, k)),   # W1 slice
                pl.BlockSpec((1, tk),         lambda i, k: (0, k)),   # b1 slice
                pl.BlockSpec((tk, d_model_p), lambda i, k: (k, 0)),   # W2 slice
                pl.BlockSpec((1, d_model_p),  lambda i, k: (0, 0)),   # b2
            ],
            out_specs=pl.BlockSpec((tm, d_model_p), lambda i, k: (i, 0)),
            scratch_shapes=scratch,
        ),
        compiler_params=pltpu.CompilerParams(
            dimension_semantics=("parallel", "arbitrary"),
            vmem_limit_bytes=vmem_limit_bytes,
        ),
    )(x_p, w1_p, b1_p, w2_p, b2_p)

    return out[:m, :d_model]


def feed_forward(x, params):
    """x: (..., d_model). `params` from prepare_ffn_params.
    Returns the same shape and dtype as x."""
    d_model = params["d_model"]
    assert x.shape[-1] == d_model, "last dim of x must equal d_model"
    cfg = _chip_config()

    x2d = x.reshape(-1, d_model)
    m = x2d.shape[0]
    d_model_p, d_ff_p = params["w1"].shape
    tm, tk, use_acc = _select_tiles(m, d_model_p, d_ff_p, x.dtype, cfg)

    out2d = _ffn_call(x2d, params["w1"], params["b1"], params["w2"], params["b2"],
                      d_model=d_model, tm=tm, tk=tk, use_acc=use_acc,
                      vmem_limit_bytes=cfg["vmem_limit"],
                      compute_dtype=params["compute_dtype"])
    return out2d.reshape(x.shape)


def _init_params(key, d_model, d_ff, dtype=jnp.float32):
    # Mimics nn.Linear's uniform(-1/sqrt(fan_in), 1/sqrt(fan_in)) init.
    k1, k2, k3, k4 = jax.random.split(key, 4)
    lim1 = 1.0 / (d_model ** 0.5)
    lim2 = 1.0 / (d_ff ** 0.5)
    w1 = jax.random.uniform(k1, (d_model, d_ff), dtype, -lim1, lim1)
    b1 = jax.random.uniform(k2, (d_ff,), dtype, -lim1, lim1)
    w2 = jax.random.uniform(k3, (d_ff, d_model), dtype, -lim2, lim2)
    b2 = jax.random.uniform(k4, (d_model,), dtype, -lim2, lim2)
    return w1, b1, w2, b2


if __name__ == "__main__":
    key = jax.random.PRNGKey(0)
    batch, seq, d_model, d_ff = 2, 8, 32, 128  # small, consistent with the module

    kx, kp = jax.random.split(key)
    x = jax.random.normal(kx, (batch, seq, d_model), jnp.float32)
    w1, b1, w2, b2 = _init_params(kp, d_model, d_ff)

    params = prepare_ffn_params(w1, b1, w2, b2)   # one-time weight prep
    y = feed_forward(x, params)
    y = jax.block_until_ready(y)
    assert y.shape == x.shape and y.dtype == x.dtype

    # Reference 1: emulate the kernel's bf16-operand / f32-accumulate precision.
    xb = x.reshape(-1, d_model).astype(jnp.bfloat16)
    h = jnp.maximum(
        jnp.dot(xb, w1.astype(jnp.bfloat16),
                preferred_element_type=jnp.float32) + b1, 0.0)
    ref_bf16 = (jnp.dot(h.astype(jnp.bfloat16), w2.astype(jnp.bfloat16),
                        preferred_element_type=jnp.float32) + b2
                ).astype(x.dtype).reshape(x.shape)
    assert jnp.allclose(y, ref_bf16, atol=1e-3, rtol=1e-3), "mismatch vs bf16 ref"

    # Reference 2: full-f32 math (eval-mode dropout = identity), loose tolerance.
    ref_f32 = jnp.maximum(x @ w1 + b1, 0.0) @ w2 + b2
    assert jnp.allclose(y, ref_f32, atol=5e-2, rtol=5e-2), "mismatch vs f32 ref"

    print("KERNEL_OK")
</pallas_src>

<mosaic_0001>
module attributes {stable_mosaic.version = 11 : i64} {
  func.func @_ffn_kernel(%arg0: i32, %arg1: i32, %arg2: memref<128x128xbf16, #tpu.memory_space<vmem>>, %arg3: memref<128x128xbf16, #tpu.memory_space<vmem>>, %arg4: memref<1x128xf32, #tpu.memory_space<vmem>>, %arg5: memref<128x128xbf16, #tpu.memory_space<vmem>>, %arg6: memref<1x128xf32, #tpu.memory_space<vmem>>, %arg7: memref<128x128xf32, #tpu.memory_space<vmem>>) attributes {dimension_semantics = [#tpu.dimension_semantics<parallel>, #tpu.dimension_semantics<arbitrary>], iteration_bounds = array<i64: 1, 1>, scalar_prefetch = 0 : i64, scratch_operands = 0 : i64, tpu.core_type = #tpu.core_type<tc>, window_params = [{transform_indices = @transform_0, window_bounds = array<i64: 128, 128>}, {transform_indices = @transform_1, window_bounds = array<i64: 128, 128>}, {transform_indices = @transform_2, window_bounds = array<i64: 1, 128>}, {transform_indices = @transform_3, window_bounds = array<i64: 128, 128>}, {pipeline_mode = #tpu.pipeline_mode<synchronous>, transform_indices = @transform_4, window_bounds = array<i64: 1, 128>}, {transform_indices = @transform_5, window_bounds = array<i64: 128, 128>}]} {
    %c0_i32 = arith.constant 0 : i32
    %0 = arith.cmpi eq, %arg1, %c0_i32 : i32
    %1 = arith.extui %0 : i1 to i32
    %c0_i32_0 = arith.constant 0 : i32
    %2 = arith.cmpi ne, %1, %c0_i32_0 : i32
    scf.if %2 {
      %c0_14 = arith.constant 0 : index
      %c0_15 = arith.constant 0 : index
      %17 = vector.load %arg6[%c0_14, %c0_15] : memref<1x128xf32, #tpu.memory_space<vmem>>, vector<1x128xf32>
      %18 = vector.shape_cast %17 : vector<1x128xf32> to vector<1x128xf32>
      %19 = vector.broadcast %18 : vector<1x128xf32> to vector<128x128xf32>
      %c0_16 = arith.constant 0 : index
      %c0_17 = arith.constant 0 : index
      %20 = vector.load %arg7[%c0_16, %c0_17] : memref<128x128xf32, #tpu.memory_space<vmem>>, vector<128x128xf32>
      tpu.vector_store %arg7[%c0_16, %c0_17], %19 {strides = array<i32>} : memref<128x128xf32, #tpu.memory_space<vmem>>, vector<128x128xf32>,
    } else {
    }
    %c0 = arith.constant 0 : index
    %c0_1 = arith.constant 0 : index
    %3 = vector.load %arg2[%c0, %c0_1] : memref<128x128xbf16, #tpu.memory_space<vmem>>, vector<128x128xbf16>
    %c0_2 = arith.constant 0 : index
    %c0_3 = arith.constant 0 : index
    %4 = vector.load %arg3[%c0_2, %c0_3] : memref<128x128xbf16, #tpu.memory_space<vmem>>, vector<128x128xbf16>
    %cst = arith.constant dense<0.000000e+00> : vector<128x128xf32>
    %5 = tpu.matmul %3, %4, %cst {dimension_numbers = #tpu.dot_dimension_numbers<[1], [0], [0], [1], [0, 0, 1, 1], [], []>} : vector<128x128xbf16>, vector<128x128xbf16>, vector<128x128xf32> -> vector<128x128xf32>
    %c0_4 = arith.constant 0 : index
    %c0_5 = arith.constant 0 : index
    %6 = vector.load %arg4[%c0_4, %c0_5] : memref<1x128xf32, #tpu.memory_space<vmem>>, vector<1x128xf32>
    %7 = vector.broadcast %6 : vector<1x128xf32> to vector<128x128xf32>
    %8 = arith.addf %5, %7 : vector<128x128xf32>
    %cst_6 = arith.constant 0.000000e+00 : f32
    %9 = vector.broadcast %cst_6 : f32 to vector<128x128xf32>
    %10 = arith.maximumf %8, %9 : vector<128x128xf32>
    %c0_7 = arith.constant 0 : index
    %c0_8 = arith.constant 0 : index
    %11 = vector.load %arg7[%c0_7, %c0_8] : memref<128x128xf32, #tpu.memory_space<vmem>>, vector<128x128xf32>
    %12 = arith.truncf %10 : vector<128x128xf32> to vector<128x128xbf16>
    %c0_9 = arith.constant 0 : index
    %c0_10 = arith.constant 0 : index
    %13 = vector.load %arg5[%c0_9, %c0_10] : memref<128x128xbf16, #tpu.memory_space<vmem>>, vector<128x128xbf16>
    %cst_11 = arith.constant dense<0.000000e+00> : vector<128x128xf32>
    %14 = tpu.matmul %12, %13, %cst_11 {dimension_numbers = #tpu.dot_dimension_numbers<[1], [0], [0], [1], [0, 0, 1, 1], [], []>} : vector<128x128xbf16>, vector<128x128xbf16>, vector<128x128xf32> -> vector<128x128xf32>
    %15 = arith.addf %11, %14 : vector<128x128xf32>
    %c0_12 = arith.constant 0 : index
    %c0_13 = arith.constant 0 : index
    %16 = vector.load %arg7[%c0_12, %c0_13] : memref<128x128xf32, #tpu.memory_space<vmem>>, vector<128x128xf32>
    tpu.vector_store %arg7[%c0_12, %c0_13], %15 {strides = array<i32>} : memref<128x128xf32, #tpu.memory_space<vmem>>, vector<128x128xf32>,
    return
  }
  func.func @transform_0(%arg0: i32, %arg1: i32) -> (i32, i32) {
    %c0_i32 = arith.constant 0 : i32
    %c0_i32_0 = arith.constant 0 : i32
    return %arg0, %c0_i32 : i32, i32
  }
  func.func @transform_1(%arg0: i32, %arg1: i32) -> (i32, i32) {
    %c0_i32 = arith.constant 0 : i32
    %c0_i32_0 = arith.constant 0 : i32
    return %c0_i32, %arg1 : i32, i32
  }
  func.func @transform_2(%arg0: i32, %arg1: i32) -> (i32, i32) {
    %c0_i32 = arith.constant 0 : i32
    %c0_i32_0 = arith.constant 0 : i32
    return %c0_i32, %arg1 : i32, i32
  }
  func.func @transform_3(%arg0: i32, %arg1: i32) -> (i32, i32) {
    %c0_i32 = arith.constant 0 : i32
    %c0_i32_0 = arith.constant 0 : i32
    return %arg1, %c0_i32 : i32, i32
  }
  func.func @transform_4(%arg0: i32, %arg1: i32) -> (i32, i32) {
    %c0_i32 = arith.constant 0 : i32
    %c0_i32_0 = arith.constant 0 : i32
    %c0_i32_1 = arith.constant 0 : i32
    return %c0_i32, %c0_i32_0 : i32, i32
  }
  func.func @transform_5(%arg0: i32, %arg1: i32) -> (i32, i32) {
    %c0_i32 = arith.constant 0 : i32
    %c0_i32_0 = arith.constant 0 : i32
    return %arg0, %c0_i32 : i32, i32
  }
}

</mosaic_0001>

<llo_original>
// kernel: _ffn_call.1
$region0: #{_ffn_call.1}
  #allocation0 [shape = 'u32[]', space=smem, size = 0x4, offset = 0x4, fixed_abs, tag = 'smem constant byte address 0x4 - core index']
  #allocation1 [shape = 'u32[144,128]{1,0:T(1,128)}', space=vmem, size = 0x12000, scoped, tag = 'internal scratch']
  %s0 = inlined_call_operand.vmem [shape: bf16[128,128], index: 0, kind: input, shape index: {}]
  %s1 = inlined_call_operand.vmem [shape: bf16[128,128], index: 1, kind: input, shape index: {}]
  %s2 = inlined_call_operand.vmem [shape: f32[1,128], index: 2, kind: input, shape index: {}]
  %s3 = inlined_call_operand.hbm [shape: bf16[128,128], index: 3, kind: input, shape index: {}]
  %s4 = inlined_call_operand.vmem [shape: f32[1,128], index: 4, kind: input, shape index: {}]
  %s5 = inlined_call_operand.vmem [shape: f32[128,128], index: 5, kind: output, shape index: {}]
  %s6 = sld [smem:[#allocation0]]
  $region38: #{_ffn_call.1} parent=0
    _
  %s8 = ssub.s32 1, %s6
  %s9 = scalar_select 0, %s8, %s6
  $region1: #{_ffn_call.1} parent=0
    #allocation2 [shape = 'u8[32768]{0}', space=vmem, size = 0x8000, scoped, tag = 'input window, operand 3, single buffered']
    #allocation3 [shape = 's32[1]{0}', space=sflag, size = 0x4, scoped, tag = 'scoped memory for _ffn_call.1']
    %10 = vsyncpa [#allocation3], 0
    // Predicated region
    $region2: #{_ffn_call.1} parent=1 // pred_check
      _
    $region3: #{_ffn_call.1} parent=1 // pred_check_branch
      %12 = sbr.rel (0) target = $region5
    $region4: #{_ffn_call.1} parent=1 // pred_region
      _
    $region5: #{_ffn_call.1} parent=1 // pred_fallthru
      _
    // Predicated region
    $region6: #{_ffn_call.1} parent=1 // pred_check
      _
    $region7: #{_ffn_call.1} parent=1 // pred_check_branch
      %14 = sbr.rel (0) target = $region9
    $region8: #{_ffn_call.1} parent=1 // pred_region
      _
    $region9: #{_ffn_call.1} parent=1 // pred_fallthru
      _
    // Predicated region
    $region10: #{_ffn_call.1} parent=1 // pred_check
      _
    $region11: #{_ffn_call.1} parent=1 // pred_check_branch
      %16 = sbr.rel (0) target = $region13
    $region12: #{_ffn_call.1} parent=1 // pred_region
      _
    $region13: #{_ffn_call.1} parent=1 // pred_fallthru
      _
    // Predicated region
    $region14: #{_ffn_call.1} parent=1 // pred_check
      _
    $region15: #{_ffn_call.1} parent=1 // pred_check_branch
      %18 = sbr.rel (0) target = $region17
    $region16: #{_ffn_call.1} parent=1 // pred_region
      %s20 = ssub.s32 1024, 1024
      %21 = vsyncadd [#allocation3], %s20
      %s22 = sshll.u32 [#allocation2], 4
      %s23 = int_to_ptr.vmem [resolvable:$true] %s22
      %28 = dma.hbm_to_vmem [thread:$0]  %s3, 1024, %s23, [#allocation3], 64, 64, 4
    $region17: #{_ffn_call.1} parent=1 // pred_fallthru
      _
    // Predicated region
    $region18: #{_ffn_call.1} parent=1 // pred_check
      _
    $region19: #{_ffn_call.1} parent=1 // pred_check_branch
      %30 = sbr.rel (0) target = $region21
    $region20: #{_ffn_call.1} parent=1 // pred_region
      _
    $region21: #{_ffn_call.1} parent=1 // pred_fallthru
      _
    // Predicated region
    $region22: #{_ffn_call.1} parent=1 // pred_check
      _
    $region23: #{_ffn_call.1} parent=1 // pred_check_branch
      %32 = sbr.rel (0) target = $region25
    $region24: #{_ffn_call.1} parent=1 // pred_region
      %33 = dma.done [#allocation3], 1024
    $region25: #{_ffn_call.1} parent=1 // pred_fallthru
      _
    %p35 = scmp.eq.s32.totalorder 0, 0
    // Predicated region
    $region26: #{_ffn_call.1} parent=1 // pred_check
      %p36 = pneg %p35
    $region27: #{_ffn_call.1} parent=1 // pred_check_branch
      %38 = sbr.rel (%p36) target = $region29
    $region28: #{_ffn_call.1} parent=1 // pred_region
      %v39 = vld [vmem:[%s4] sm:$0x1]
      %v41 = vlaneseq
      %v42 = vshrl.u32 %v41, 7
      %v43 = vsub.s32 0, %v42
      %v44 = vrot.slane %v39, %v43
      %46 = vst [vmem:[%s5] sm:$0xff] %v44
      %47 = vst [vmem:[%s5 + $0x8] sm:$0xff] %v44
      %48 = vst [vmem:[%s5 + $0x10] sm:$0xff] %v44
      %49 = vst [vmem:[%s5 + $0x18] sm:$0xff] %v44
      %50 = vst [vmem:[%s5 + $0x20] sm:$0xff] %v44
      %51 = vst [vmem:[%s5 + $0x28] sm:$0xff] %v44
      %52 = vst [vmem:[%s5 + $0x30] sm:$0xff] %v44
      %53 = vst [vmem:[%s5 + $0x38] sm:$0xff] %v44
      %54 = vst [vmem:[%s5 + $0x40] sm:$0xff] %v44
      %55 = vst [vmem:[%s5 + $0x48] sm:$0xff] %v44
      %56 = vst [vmem:[%s5 + $0x50] sm:$0xff] %v44
      %57 = vst [vmem:[%s5 + $0x58] sm:$0xff] %v44
      %58 = vst [vmem:[%s5 + $0x60] sm:$0xff] %v44
      %59 = vst [vmem:[%s5 + $0x68] sm:$0xff] %v44
      %60 = vst [vmem:[%s5 + $0x70] sm:$0xff] %v44
      %61 = vst [vmem:[%s5 + $0x78] sm:$0xff] %v44
    $region29: #{_ffn_call.1} parent=1 // pred_fallthru
      _
    %v62 = vld [vmem:[%s0] sm:$0xf]
    %v63 = vld [vmem:[%s0 + $0x4] sm:$0xf]
    %v64 = vld [vmem:[%s0 + $0x8] sm:$0xf]
    %v65 = vld [vmem:[%s0 + $0xc] sm:$0xf]
    %v66 = vld [vmem:[%s0 + $0x10] sm:$0xf]
    %v67 = vld [vmem:[%s0 + $0x14] sm:$0xf]
    %v68 = vld [vmem:[%s0 + $0x18] sm:$0xf]
    %v69 = vld [vmem:[%s0 + $0x1c] sm:$0xf]
    %v70 = vld [vmem:[%s0 + $0x20] sm:$0xf]
    %v71 = vld [vmem:[%s0 + $0x24] sm:$0xf]
    %v72 = vld [vmem:[%s0 + $0x28] sm:$0xf]
    %v73 = vld [vmem:[%s0 + $0x2c] sm:$0xf]
    %v74 = vld [vmem:[%s0 + $0x30] sm:$0xf]
    %v75 = vld [vmem:[%s0 + $0x34] sm:$0xf]
    %v76 = vld [vmem:[%s0 + $0x38] sm:$0xf]
    %v77 = vld [vmem:[%s0 + $0x3c] sm:$0xf]
    %v78 = vld [vmem:[%s1] sm:$0xf]
    %v79 = vld [vmem:[%s1 + $0x4] sm:$0xf]
    %v80 = vld [vmem:[%s1 + $0x8] sm:$0xf]
    %v81 = vld [vmem:[%s1 + $0xc] sm:$0xf]
    %v82 = vld [vmem:[%s1 + $0x10] sm:$0xf]
    %v83 = vld [vmem:[%s1 + $0x14] sm:$0xf]
    %v84 = vld [vmem:[%s1 + $0x18] sm:$0xf]
    %v85 = vld [vmem:[%s1 + $0x1c] sm:$0xf]
    %v86 = vld [vmem:[%s1 + $0x20] sm:$0xf]
    %v87 = vld [vmem:[%s1 + $0x24] sm:$0xf]
    %v88 = vld [vmem:[%s1 + $0x28] sm:$0xf]
    %v89 = vld [vmem:[%s1 + $0x2c] sm:$0xf]
    %v90 = vld [vmem:[%s1 + $0x30] sm:$0xf]
    %v91 = vld [vmem:[%s1 + $0x34] sm:$0xf]
    %v92 = vld [vmem:[%s1 + $0x38] sm:$0xf]
    %v93 = vld [vmem:[%s1 + $0x3c] sm:$0xf]
    %v94 = vld [vmem:[%s2] sm:$0x1]
    %v96 = vlaneseq
    %v97 = vshrl.u32 %v96, 7
    %v98 = vsub.s32 0, %v97
    %v99 = vrot.slane %v94, %v98
    %v117 = vunpack.c.l.b16 %v62
    %v118 = vunpack.c.l.b16 %v63
    %v119 = vunpack.c.l.b16 %v64
    %v120 = vunpack.c.l.b16 %v65
    %v121 = vunpack.c.l.b16 %v66
    %v122 = vunpack.c.l.b16 %v67
    %v123 = vunpack.c.l.b16 %v68
    %v124 = vunpack.c.l.b16 %v69
    %v125 = vunpack.c.l.b16 %v70
    %v126 = vunpack.c.l.b16 %v71
    %v127 = vunpack.c.l.b16 %v72
    %v128 = vunpack.c.l.b16 %v73
    %v129 = vunpack.c.l.b16 %v74
    %v130 = vunpack.c.l.b16 %v75
    %v131 = vunpack.c.l.b16 %v76
    %v132 = vunpack.c.l.b16 %v77
    %v133 = vpack.c.b16 %v118, %v117
    %v134 = vpack.c.b16 %v120, %v119
    %v135 = vpack.c.b16 %v122, %v121
    %v136 = vpack.c.b16 %v124, %v123
    %v137 = vpack.c.b16 %v126, %v125
    %v138 = vpack.c.b16 %v128, %v127
    %v139 = vpack.c.b16 %v130, %v129
    %v140 = vpack.c.b16 %v132, %v131
    %v165 = vunpack.c.l.b16 %v78
    %v166 = vunpack.c.l.b16 %v79
    %v167 = vunpack.c.l.b16 %v80
    %v168 = vunpack.c.l.b16 %v81
    %v169 = vunpack.c.l.b16 %v82
    %v170 = vunpack.c.l.b16 %v83
    %v171 = vunpack.c.l.b16 %v84
    %v172 = vunpack.c.l.b16 %v85
    %v173 = vunpack.c.l.b16 %v86
    %v174 = vunpack.c.l.b16 %v87
    %v175 = vunpack.c.l.b16 %v88
    %v176 = vunpack.c.l.b16 %v89
    %v177 = vunpack.c.l.b16 %v90
    %v178 = vunpack.c.l.b16 %v91
    %v179 = vunpack.c.l.b16 %v92
    %v180 = vunpack.c.l.b16 %v93
    %v181 = vpack.c.b16 %v166, %v165
    %v182 = vpack.c.b16 %v168, %v167
    %v183 = vpack.c.b16 %v170, %v169
    %v184 = vpack.c.b16 %v172, %v171
    %v185 = vpack.c.b16 %v174, %v173
    %v186 = vpack.c.b16 %v176, %v175
    %v187 = vpack.c.b16 %v178, %v177
    %v188 = vpack.c.b16 %v180, %v179
    %197 = vmatprep.subr.bf16.mxu0 0
    %198 = vmatpush1.bf16.msra.mxu0 %v188
    %199 = vmatprep.subr.bf16.mxu0 0
    %200 = vmatpush1.bf16.msra.mxu0 %v187
    %201 = vmatprep.subr.bf16.mxu0 0
    %202 = vmatpush1.bf16.msra.mxu0 %v186
    %203 = vmatprep.subr.bf16.mxu0 0
    %204 = vmatpush1.bf16.msra.mxu0 %v185
    %205 = vmatprep.subr.bf16.mxu0 0
    %206 = vmatpush1.bf16.msra.mxu0 %v184
    %207 = vmatprep.subr.bf16.mxu0 0
    %208 = vmatpush1.bf16.msra.mxu0 %v183
    %209 = vmatprep.subr.bf16.mxu0 0
    %210 = vmatpush1.bf16.msra.mxu0 %v182
    %211 = vmatprep.subr.bf16.mxu0 0
    %212 = vmatpush1.bf16.msra.mxu0 %v181
    %213 = vmatprep.subr.bf16.mxu0 0
    %214 = vmatpush2.bf16.msra.mxu0 0
    %215 = vmatprep.subr.bf16.mxu0 0
    %216 = vmatpush2.bf16.msra.mxu0 0
    %217 = vmatprep.subr.bf16.mxu0 0
    %218 = vmatpush2.bf16.msra.mxu0 0
    %219 = vmatprep.subr.bf16.mxu0 0
    %220 = vmatpush2.bf16.msra.mxu0 0
    %221 = vmatprep.subr.bf16.mxu0 0
    %222 = vmatpush2.bf16.msra.mxu0 0
    %223 = vmatprep.subr.bf16.mxu0 0
    %224 = vmatpush2.bf16.msra.mxu0 0
    %225 = vmatprep.subr.bf16.mxu0 0
    %226 = vmatpush2.bf16.msra.mxu0 0
    %227 = vmatprep.subr.bf16.mxu0 0
    %228 = vmatpush2.bf16.msra.mxu0 0
    %229 = vmatprep.mubr.bf16.mxu0 0
    %230 = vmatmul.mubr.bf16.gmra.mxu0 %v133
    %v231 = vpop.f32.mrf.mxu0
    %v232 = vadd.f32 %v99, %v231
    %v233 = vpop.f32.mrf.mxu0
    %v234 = vpop.f32.mrf.mxu0
    %v235 = vadd.f32 %v99, %v234
    %v236 = vpop.f32.mrf.mxu0
    %237 = vmatprep.mubr.bf16.mxu0 0
    %238 = vmatmul.mubr.bf16.gmra.mxu0 %v134
    %v239 = vpop.f32.mrf.mxu0
    %v240 = vadd.f32 %v99, %v239
    %v241 = vpop.f32.mrf.mxu0
    %v242 = vpop.f32.mrf.mxu0
    %v243 = vadd.f32 %v99, %v242
    %v244 = vpop.f32.mrf.mxu0
    %245 = vmatprep.mubr.bf16.mxu0 0
    %246 = vmatmul.mubr.bf16.gmra.mxu0 %v135
    %v247 = vpop.f32.mrf.mxu0
    %v248 = vadd.f32 %v99, %v247
    %v249 = vpop.f32.mrf.mxu0
    %v250 = vpop.f32.mrf.mxu0
    %v251 = vadd.f32 %v99, %v250
    %v252 = vpop.f32.mrf.mxu0
    %253 = vmatprep.mubr.bf16.mxu0 0
    %254 = vmatmul.mubr.bf16.gmra.mxu0 %v136
    %v255 = vpop.f32.mrf.mxu0
    %v256 = vadd.f32 %v99, %v255
    %v257 = vpop.f32.mrf.mxu0
    %v258 = vpop.f32.mrf.mxu0
    %v259 = vadd.f32 %v99, %v258
    %v260 = vpop.f32.mrf.mxu0
    %261 = vmatprep.mubr.bf16.mxu0 0
    %262 = vmatmul.mubr.bf16.gmra.mxu0 %v137
    %v263 = vpop.f32.mrf.mxu0
    %v264 = vadd.f32 %v99, %v263
    %v265 = vpop.f32.mrf.mxu0
    %v266 = vpop.f32.mrf.mxu0
    %v267 = vadd.f32 %v99, %v266
    %v268 = vpop.f32.mrf.mxu0
    %269 = vmatprep.mubr.bf16.mxu0 0
    %270 = vmatmul.mubr.bf16.gmra.mxu0 %v138
    %v271 = vpop.f32.mrf.mxu0
    %v272 = vadd.f32 %v99, %v271
    %v273 = vpop.f32.mrf.mxu0
    %v274 = vpop.f32.mrf.mxu0
    %v275 = vadd.f32 %v99, %v274
    %v276 = vpop.f32.mrf.mxu0
    %277 = vmatprep.mubr.bf16.mxu0 0
    %278 = vmatmul.mubr.bf16.gmra.mxu0 %v139
    %v279 = vpop.f32.mrf.mxu0
    %v280 = vadd.f32 %v99, %v279
    %v281 = vpop.f32.mrf.mxu0
    %v282 = vpop.f32.mrf.mxu0
    %v283 = vadd.f32 %v99, %v282
    %v284 = vpop.f32.mrf.mxu0
    %285 = vmatprep.mubr.bf16.mxu0 0
    %286 = vmatmul.mubr.bf16.gmra.mxu0 %v140
    %v287 = vpop.f32.mrf.mxu0
    %v288 = vadd.f32 %v99, %v287
    %v289 = vpop.f32.mrf.mxu0
    %v290 = vpop.f32.mrf.mxu0
    %v291 = vadd.f32 %v99, %v290
    %v292 = vpop.f32.mrf.mxu0
    %293 = vdwg.mxu0
    %v294 = vmax.f32 %v232, 0.0
    %v295 = vmax.f32 %v235, 0.0
    %v296 = vmax.f32 %v240, 0.0
    %v297 = vmax.f32 %v243, 0.0
    %v298 = vmax.f32 %v248, 0.0
    %v299 = vmax.f32 %v251, 0.0
    %v300 = vmax.f32 %v256, 0.0
    %v301 = vmax.f32 %v259, 0.0
    %v302 = vmax.f32 %v264, 0.0
    %v303 = vmax.f32 %v267, 0.0
    %v304 = vmax.f32 %v272, 0.0
    %v305 = vmax.f32 %v275, 0.0
    %v306 = vmax.f32 %v280, 0.0
    %v307 = vmax.f32 %v283, 0.0
    %v308 = vmax.f32 %v288, 0.0
    %v309 = vmax.f32 %v291, 0.0
    %v310 = vld [vmem:[%s5] sm:$0xff]
    %v311 = vld [vmem:[%s5 + $0x8] sm:$0xff]
    %v312 = vld [vmem:[%s5 + $0x10] sm:$0xff]
    %v313 = vld [vmem:[%s5 + $0x18] sm:$0xff]
    %v314 = vld [vmem:[%s5 + $0x20] sm:$0xff]
    %v315 = vld [vmem:[%s5 + $0x28] sm:$0xff]
    %v316 = vld [vmem:[%s5 + $0x30] sm:$0xff]
    %v317 = vld [vmem:[%s5 + $0x38] sm:$0xff]
    %v318 = vld [vmem:[%s5 + $0x40] sm:$0xff]
    %v319 = vld [vmem:[%s5 + $0x48] sm:$0xff]
    %v320 = vld [vmem:[%s5 + $0x50] sm:$0xff]
    %v321 = vld [vmem:[%s5 + $0x58] sm:$0xff]
    %v322 = vld [vmem:[%s5 + $0x60] sm:$0xff]
    %v323 = vld [vmem:[%s5 + $0x68] sm:$0xff]
    %v324 = vld [vmem:[%s5 + $0x70] sm:$0xff]
    %v325 = vld [vmem:[%s5 + $0x78] sm:$0xff]
    %v326 = vpack.c.bf16 %v295, %v294
    %v327 = vpack.c.bf16 %v297, %v296
    %v328 = vpack.c.bf16 %v299, %v298
    %v329 = vpack.c.bf16 %v301, %v300
    %v330 = vpack.c.bf16 %v303, %v302
    %v331 = vpack.c.bf16 %v305, %v304
    %v332 = vpack.c.bf16 %v307, %v306
    %v333 = vpack.c.bf16 %v309, %v308
    %v334 = vld [vmem:[#allocation2] sm:$0xf]
    %v335 = vld [vmem:[#allocation2 + $0x4] sm:$0xf]
    %v336 = vld [vmem:[#allocation2 + $0x8] sm:$0xf]
    %v337 = vld [vmem:[#allocation2 + $0xc] sm:$0xf]
    %v338 = vld [vmem:[#allocation2 + $0x10] sm:$0xf]
    %v339 = vld [vmem:[#allocation2 + $0x14] sm:$0xf]
    %v340 = vld [vmem:[#allocation2 + $0x18] sm:$0xf]
    %v341 = vld [vmem:[#allocation2 + $0x1c] sm:$0xf]
    %v342 = vld [vmem:[#allocation2 + $0x20] sm:$0xf]
    %v343 = vld [vmem:[#allocation2 + $0x24] sm:$0xf]
    %v344 = vld [vmem:[#allocation2 + $0x28] sm:$0xf]
    %v345 = vld [vmem:[#allocation2 + $0x2c] sm:$0xf]
    %v346 = vld [vmem:[#allocation2 + $0x30] sm:$0xf]
    %v347 = vld [vmem:[#allocation2 + $0x34] sm:$0xf]
    %v348 = vld [vmem:[#allocation2 + $0x38] sm:$0xf]
    %v349 = vld [vmem:[#allocation2 + $0x3c] sm:$0xf]
    %v366 = vunpack.c.l.b16 %v334
    %v367 = vunpack.c.l.b16 %v335
    %v368 = vunpack.c.l.b16 %v336
    %v369 = vunpack.c.l.b16 %v337
    %v370 = vunpack.c.l.b16 %v338
    %v371 = vunpack.c.l.b16 %v339
    %v372 = vunpack.c.l.b16 %v340
    %v373 = vunpack.c.l.b16 %v341
    %v374 = vunpack.c.l.b16 %v342
    %v375 = vunpack.c.l.b16 %v343
    %v376 = vunpack.c.l.b16 %v344
    %v377 = vunpack.c.l.b16 %v345
    %v378 = vunpack.c.l.b16 %v346
    %v379 = vunpack.c.l.b16 %v347
    %v380 = vunpack.c.l.b16 %v348
    %v381 = vunpack.c.l.b16 %v349
    %v382 = vpack.c.b16 %v367, %v366
    %v383 = vpack.c.b16 %v369, %v368
    %v384 = vpack.c.b16 %v371, %v370
    %v385 = vpack.c.b16 %v373, %v372
    %v386 = vpack.c.b16 %v375, %v374
    %v387 = vpack.c.b16 %v377, %v376
    %v388 = vpack.c.b16 %v379, %v378
    %v389 = vpack.c.b16 %v381, %v380
    %398 = vmatprep.subr.bf16.mxu0 0
    %399 = vmatpush1.bf16.msra.mxu0 %v389
    %400 = vmatprep.subr.bf16.mxu0 0
    %401 = vmatpush1.bf16.msra.mxu0 %v388
    %402 = vmatprep.subr.bf16.mxu0 0
    %403 = vmatpush1.bf16.msra.mxu0 %v387
    %404 = vmatprep.subr.bf16.mxu0 0
    %405 = vmatpush1.bf16.msra.mxu0 %v386
    %406 = vmatprep.subr.bf16.mxu0 0
    %407 = vmatpush1.bf16.msra.mxu0 %v385
    %408 = vmatprep.subr.bf16.mxu0 0
    %409 = vmatpush1.bf16.msra.mxu0 %v384
    %410 = vmatprep.subr.bf16.mxu0 0
    %411 = vmatpush1.bf16.msra.mxu0 %v383
    %412 = vmatprep.subr.bf16.mxu0 0
    %413 = vmatpush1.bf16.msra.mxu0 %v382
    %414 = vmatprep.subr.bf16.mxu0 0
    %415 = vmatpush2.bf16.msra.mxu0 0
    %416 = vmatprep.subr.bf16.mxu0 0
    %417 = vmatpush2.bf16.msra.mxu0 0
    %418 = vmatprep.subr.bf16.mxu0 0
    %419 = vmatpush2.bf16.msra.mxu0 0
    %420 = vmatprep.subr.bf16.mxu0 0
    %421 = vmatpush2.bf16.msra.mxu0 0
    %422 = vmatprep.subr.bf16.mxu0 0
    %423 = vmatpush2.bf16.msra.mxu0 0
    %424 = vmatprep.subr.bf16.mxu0 0
    %425 = vmatpush2.bf16.msra.mxu0 0
    %426 = vmatprep.subr.bf16.mxu0 0
    %427 = vmatpush2.bf16.msra.mxu0 0
    %428 = vmatprep.subr.bf16.mxu0 0
    %429 = vmatpush2.bf16.msra.mxu0 0
    %430 = vmatprep.mubr.bf16.mxu0 0
    %431 = vmatmul.mubr.bf16.gmra.mxu0 %v326
    %v432 = vpop.f32.mrf.mxu0
    %v433 = vadd.f32 0.0, %v432
    %v434 = vpop.f32.mrf.mxu0
    %v435 = vpop.f32.mrf.mxu0
    %v436 = vadd.f32 0.0, %v435
    %v437 = vpop.f32.mrf.mxu0
    %438 = vmatprep.mubr.bf16.mxu0 0
    %439 = vmatmul.mubr.bf16.gmra.mxu0 %v327
    %v440 = vpop.f32.mrf.mxu0
    %v441 = vadd.f32 0.0, %v440
    %v442 = vpop.f32.mrf.mxu0
    %v443 = vpop.f32.mrf.mxu0
    %v444 = vadd.f32 0.0, %v443
    %v445 = vpop.f32.mrf.mxu0
    %446 = vmatprep.mubr.bf16.mxu0 0
    %447 = vmatmul.mubr.bf16.gmra.mxu0 %v328
    %v448 = vpop.f32.mrf.mxu0
    %v449 = vadd.f32 0.0, %v448
    %v450 = vpop.f32.mrf.mxu0
    %v451 = vpop.f32.mrf.mxu0
    %v452 = vadd.f32 0.0, %v451
    %v453 = vpop.f32.mrf.mxu0
    %454 = vmatprep.mubr.bf16.mxu0 0
    %455 = vmatmul.mubr.bf16.gmra.mxu0 %v329
    %v456 = vpop.f32.mrf.mxu0
    %v457 = vadd.f32 0.0, %v456
    %v458 = vpop.f32.mrf.mxu0
    %v459 = vpop.f32.mrf.mxu0
    %v460 = vadd.f32 0.0, %v459
    %v461 = vpop.f32.mrf.mxu0
    %462 = vmatprep.mubr.bf16.mxu0 0
    %463 = vmatmul.mubr.bf16.gmra.mxu0 %v330
    %v464 = vpop.f32.mrf.mxu0
    %v465 = vadd.f32 0.0, %v464
    %v466 = vpop.f32.mrf.mxu0
    %v467 = vpop.f32.mrf.mxu0
    %v468 = vadd.f32 0.0, %v467
    %v469 = vpop.f32.mrf.mxu0
    %470 = vmatprep.mubr.bf16.mxu0 0
    %471 = vmatmul.mubr.bf16.gmra.mxu0 %v331
    %v472 = vpop.f32.mrf.mxu0
    %v473 = vadd.f32 0.0, %v472
    %v474 = vpop.f32.mrf.mxu0
    %v475 = vpop.f32.mrf.mxu0
    %v476 = vadd.f32 0.0, %v475
    %v477 = vpop.f32.mrf.mxu0
    %478 = vmatprep.mubr.bf16.mxu0 0
    %479 = vmatmul.mubr.bf16.gmra.mxu0 %v332
    %v480 = vpop.f32.mrf.mxu0
    %v481 = vadd.f32 0.0, %v480
    %v482 = vpop.f32.mrf.mxu0
    %v483 = vpop.f32.mrf.mxu0
    %v484 = vadd.f32 0.0, %v483
    %v485 = vpop.f32.mrf.mxu0
    %486 = vmatprep.mubr.bf16.mxu0 0
    %487 = vmatmul.mubr.bf16.gmra.mxu0 %v333
    %v488 = vpop.f32.mrf.mxu0
    %v489 = vadd.f32 0.0, %v488
    %v490 = vpop.f32.mrf.mxu0
    %v491 = vpop.f32.mrf.mxu0
    %v492 = vadd.f32 0.0, %v491
    %v493 = vpop.f32.mrf.mxu0
    %494 = vdwg.mxu0
    %v495 = vadd.f32 %v310, %v433
    %v496 = vadd.f32 %v311, %v436
    %v497 = vadd.f32 %v312, %v441
    %v498 = vadd.f32 %v313, %v444
    %v499 = vadd.f32 %v314, %v449
    %v500 = vadd.f32 %v315, %v452
    %v501 = vadd.f32 %v316, %v457
    %v502 = vadd.f32 %v317, %v460
    %v503 = vadd.f32 %v318, %v465
    %v504 = vadd.f32 %v319, %v468
    %v505 = vadd.f32 %v320, %v473
    %v506 = vadd.f32 %v321, %v476
    %v507 = vadd.f32 %v322, %v481
    %v508 = vadd.f32 %v323, %v484
    %v509 = vadd.f32 %v324, %v489
    %v510 = vadd.f32 %v325, %v492
    %511 = vst [vmem:[%s5] sm:$0xff] %v495
    %512 = vst [vmem:[%s5 + $0x8] sm:$0xff] %v496
    %513 = vst [vmem:[%s5 + $0x10] sm:$0xff] %v497
    %514 = vst [vmem:[%s5 + $0x18] sm:$0xff] %v498
    %515 = vst [vmem:[%s5 + $0x20] sm:$0xff] %v499
    %516 = vst [vmem:[%s5 + $0x28] sm:$0xff] %v500
    %517 = vst [vmem:[%s5 + $0x30] sm:$0xff] %v501
    %518 = vst [vmem:[%s5 + $0x38] sm:$0xff] %v502
    %519 = vst [vmem:[%s5 + $0x40] sm:$0xff] %v503
    %520 = vst [vmem:[%s5 + $0x48] sm:$0xff] %v504
    %521 = vst [vmem:[%s5 + $0x50] sm:$0xff] %v505
    %522 = vst [vmem:[%s5 + $0x58] sm:$0xff] %v506
    %523 = vst [vmem:[%s5 + $0x60] sm:$0xff] %v507
    %524 = vst [vmem:[%s5 + $0x68] sm:$0xff] %v508
    %525 = vst [vmem:[%s5 + $0x70] sm:$0xff] %v509
    %526 = vst [vmem:[%s5 + $0x78] sm:$0xff] %v510
    // Predicated region
    $region30: #{_ffn_call.1} parent=1 // pred_check
      _
    $region31: #{_ffn_call.1} parent=1 // pred_check_branch
      %528 = sbr.rel (0) target = $region33
    $region32: #{_ffn_call.1} parent=1 // pred_region
      _
    $region33: #{_ffn_call.1} parent=1 // pred_fallthru
      _
    // Predicated region
    $region34: #{_ffn_call.1} parent=1 // pred_check
      _
    $region35: #{_ffn_call.1} parent=1 // pred_check_branch
      %530 = sbr.rel (0) target = $region37
    $region36: #{_ffn_call.1} parent=1 // pred_region
      _
    $region37: #{_ffn_call.1} parent=1 // pred_fallthru
      _
    %531 = vsyncpa [#allocation3], 1

</llo_original>
